<compile_context>
chip_gen: v5e
topology: v5e:2x2
jax: 0.10.0
libtpu: 0.0.40
codegen_flags: <defaults>
</compile_context>

<pallas_src>
import jax
import jax.numpy as jnp
import numpy as np
from jax.experimental import pallas as pl
from jax.experimental.pallas import tpu as pltpu


def _gelu_exact(x):
    """Exact (erf-based) GELU matching torch.nn.GELU(approximate='none').

    erf via the Abramowitz & Stegun 7.1.26 polynomial (|error| < 1.5e-7).
    The rational term 1/(1 + p*a) uses the EUP approximate reciprocal plus one
    Newton refinement step (error ~ eps^2, well inside f32), so the divide's
    VALU cost is replaced by one EUP op + 2 cheap VPU ops.
    """
    z = x * 0.7071067811865476          # x / sqrt(2)
    a = jnp.abs(z)
    denom = 1.0 + 0.3275911 * a
    t = pl.reciprocal(denom, approx=True)
    t = t * (2.0 - denom * t)           # one Newton step -> ~f32 accuracy
    poly = t * (0.254829592
           + t * (-0.284496736
           + t * (1.421413741
           + t * (-1.453152027
           + t * 1.061405429))))
    erf_abs = 1.0 - poly * jnp.exp(-(a * a))
    erf_z = jnp.where(z >= 0.0, erf_abs, -erf_abs)
    return 0.5 * x * (1.0 + erf_z)


def _ffn_kernel(x_ref, w_up_ref, b_up_ref, w_down_ref, b_down_ref, o_ref):
    # x_ref: (tm, E) rows of the flattened (B*S, E) input.
    # MXU-operand dtype follows the stored weight dtype; the cast of x happens
    # in-kernel so it hides under MXU/DMA instead of costing an HBM pass.
    x = x_ref[...].astype(w_up_ref.dtype)

    # Up-projection on the MXU, f32 accumulation.
    h = jnp.dot(x, w_up_ref[...], preferred_element_type=jnp.float32)
    h = h + b_up_ref[...].astype(jnp.float32)       # (tm, F) f32

    # Exact GELU in f32 (VPU + EUP).
    h = _gelu_exact(h)

    # Down-projection; cast activations to the weight dtype so bf16 weights
    # give a true bf16 MXU pass. f32 accumulation.
    y = jnp.dot(h.astype(w_down_ref.dtype), w_down_ref[...],
                preferred_element_type=jnp.float32)
    y = y + b_down_ref[...].astype(jnp.float32)

    # Dropout: identity in eval mode.
    o_ref[...] = y.astype(o_ref.dtype)


def _round_up(n, m):
    return ((n + m - 1) // m) * m


def feed_forward(x, w_up, b_up, w_down, b_down, *, out_dtype=None):
    """FeedForward forward pass (eval mode).

    x:      (B, S, E)
    w_up:   (E, F)   b_up:   (1, F)
    w_down: (F, E)   b_down: (1, E)
    (weights transposed relative to torch.nn.Linear's (out, in))

    MXU operand dtype follows the weight dtype: pass bf16 weights for the
    bf16 MXU fast path (valid on v5e/v6e/v7x; accumulation and GELU stay f32).
    """
    B, S, E = x.shape
    E2, F = w_up.shape
    if E2 != E or w_down.shape != (F, E):
        raise ValueError("weight shapes inconsistent with x")
    out_dtype = x.dtype if out_dtype is None else out_dtype

    M = B * S
    x2 = x.reshape(M, E)

    # Ragged row counts: pad up to a multiple of 8 (sublane granularity)
    # instead of staging the whole input as a single full-extent block.
    M_pad = _round_up(M, 8)
    if M_pad != M:
        x2 = jnp.pad(x2, ((0, M_pad - M), (0, 0)))

    x_bytes = np.dtype(x.dtype).itemsize
    o_bytes = np.dtype(out_dtype).itemsize
    w_bytes = np.dtype(w_up.dtype).itemsize
    b_bytes = np.dtype(b_up.dtype).itemsize
    resident_bytes = 2 * E * F * w_bytes + (F + E) * b_bytes

    def _vmem_need(t):
        return (resident_bytes
                + 2 * t * E * (x_bytes + o_bytes)   # double-buffered in/out blocks
                + 4 * t * F * 4)                    # f32 hidden + GELU temporaries

    # Row tile: as big as the VMEM budget allows (tile sweeps show 512-1024 row
    # tiles reach ~85% of HBM roofline); only split when M or VMEM forces it.
    # Budget capped at 48 MiB so it fits v7x's 64 MiB/TC with headroom.
    VMEM_CAP = 48 << 20
    tm = _round_up(min(M_pad, 1024), 8)
    while tm > 8 and _vmem_need(tm) > VMEM_CAP:
        tm = _round_up(max(8, tm // 2), 8)

    grid = (pl.cdiv(M_pad, tm),)
    vmem_limit = int(min(max(_vmem_need(tm) * 5 // 4 + (2 << 20), 16 << 20),
                         56 << 20))

    # Weights/biases: whole-array VMEM residency (constant across the grid),
    # DMA'd once, not double-buffered per step.
    resident = pl.BlockSpec(memory_space=pltpu.MemorySpace.VMEM)

    out = pl.pallas_call(
        _ffn_kernel,
        out_shape=jax.ShapeDtypeStruct((M_pad, E), out_dtype),
        grid_spec=pltpu.PrefetchScalarGridSpec(
            num_scalar_prefetch=0,
            grid=grid,
            in_specs=[
                pl.BlockSpec((tm, E), lambda i: (i, 0)),   # x rows
                resident,                                   # W_up  (E, F)
                resident,                                   # b_up  (1, F)
                resident,                                   # W_down (F, E)
                resident,                                   # b_down (1, E)
            ],
            out_specs=pl.BlockSpec((tm, E), lambda i: (i, 0)),
        ),
        compiler_params=pltpu.CompilerParams(
            dimension_semantics=("parallel",),
            vmem_limit_bytes=vmem_limit),
    )(x2, w_up, b_up, w_down, b_down)

    if M_pad != M:
        out = out[:M]
    return out.reshape(B, S, E)


def _reference(x, w_up, b_up, w_down, b_down):
    """Pure-JAX reference matching the PyTorch forward (eval mode)."""
    h = x @ w_up + b_up.reshape(-1)
    h = jax.nn.gelu(h, approximate=False)    # exact erf GELU == torch.nn.GELU()
    return h @ w_down + b_down.reshape(-1)


def _make_case(key, B, S, E, expansion):
    F = E * expansion
    kx, k1, k2, k3, k4 = jax.random.split(key, 5)
    x = jax.random.normal(kx, (B, S, E), dtype=jnp.float32)
    w_up = jax.random.normal(k1, (E, F), dtype=jnp.float32) * (1.0 / np.sqrt(E))
    b_up = jax.random.normal(k2, (1, F), dtype=jnp.float32) * 0.01
    w_down = jax.random.normal(k3, (F, E), dtype=jnp.float32) * (1.0 / np.sqrt(F))
    b_down = jax.random.normal(k4, (1, E), dtype=jnp.float32) * 0.01
    return x, w_up, b_up, w_down, b_down


if __name__ == "__main__":
    B, S = 2, 8
    key = jax.random.PRNGKey(0)
    ka, kb = jax.random.split(key)

    # Case 1: lane-dense shapes (E=128, F=512 -> multiples of 128), f32 path.
    x, w_up, b_up, w_down, b_down = _make_case(ka, B, S, E=128, expansion=4)
    y_ref = _reference(x, w_up, b_up, w_down, b_down)

    y = feed_forward(x, w_up, b_up, w_down, b_down)
    y = jax.block_until_ready(y)
    np.testing.assert_allclose(np.asarray(y), np.asarray(y_ref),
                               rtol=2e-4, atol=2e-4)

    # Case 1b: bf16-stored weights (native bf16 MXU path on v5e/v6e/v7x),
    # bf16 output; accumulation and GELU stay f32 inside the kernel.
    y_bf16 = feed_forward(x, w_up.astype(jnp.bfloat16), b_up,
                          w_down.astype(jnp.bfloat16), b_down,
                          out_dtype=jnp.bfloat16)
    y_bf16 = jax.block_until_ready(y_bf16)
    np.testing.assert_allclose(np.asarray(y_bf16, dtype=np.float32),
                               np.asarray(y_ref), rtol=5e-2, atol=5e-2)

    # Case 2: tiny embed (E=32, F=128) consistent with the toy module config;
    # correct but lane-sparse -- kept as a correctness check only.
    x, w_up, b_up, w_down, b_down = _make_case(kb, B, S, E=32, expansion=4)
    y_ref = _reference(x, w_up, b_up, w_down, b_down)
    y = feed_forward(x, w_up, b_up, w_down, b_down)
    y = jax.block_until_ready(y)
    np.testing.assert_allclose(np.asarray(y), np.asarray(y_ref),
                               rtol=2e-4, atol=2e-4)

    print("KERNEL_OK")
</pallas_src>

<mosaic_0001>
module attributes {stable_mosaic.version = 11 : i64} {
  func.func @_ffn_kernel(%arg0: i32, %arg1: memref<16x128xf32, #tpu.memory_space<vmem>>, %arg2: memref<128x512xf32, #tpu.memory_space<vmem>>, %arg3: memref<1x512xf32, #tpu.memory_space<vmem>>, %arg4: memref<512x128xf32, #tpu.memory_space<vmem>>, %arg5: memref<1x128xf32, #tpu.memory_space<vmem>>, %arg6: memref<16x128xf32, #tpu.memory_space<vmem>>) attributes {dimension_semantics = [#tpu.dimension_semantics<parallel>], iteration_bounds = array<i64: 1>, scalar_prefetch = 0 : i64, scratch_operands = 0 : i64, tpu.core_type = #tpu.core_type<tc>, window_params = [{transform_indices = @transform_0, window_bounds = array<i64: 16, 128>}, {pipeline_mode = #tpu.pipeline_mode<synchronous>, transform_indices = @transform_1, window_bounds = array<i64: 128, 512>}, {pipeline_mode = #tpu.pipeline_mode<synchronous>, transform_indices = @transform_2, window_bounds = array<i64: 1, 512>}, {pipeline_mode = #tpu.pipeline_mode<synchronous>, transform_indices = @transform_3, window_bounds = array<i64: 512, 128>}, {pipeline_mode = #tpu.pipeline_mode<synchronous>, transform_indices = @transform_4, window_bounds = array<i64: 1, 128>}, {transform_indices = @transform_5, window_bounds = array<i64: 16, 128>}]} {
    %c0 = arith.constant 0 : index
    %c0_0 = arith.constant 0 : index
    %0 = vector.load %arg1[%c0, %c0_0] : memref<16x128xf32, #tpu.memory_space<vmem>>, vector<16x128xf32>
    %c0_1 = arith.constant 0 : index
    %c0_2 = arith.constant 0 : index
    %1 = vector.load %arg2[%c0_1, %c0_2] : memref<128x512xf32, #tpu.memory_space<vmem>>, vector<128x512xf32>
    %cst = arith.constant dense<0.000000e+00> : vector<16x512xf32>
    %2 = tpu.matmul %0, %1, %cst {dimension_numbers = #tpu.dot_dimension_numbers<[1], [0], [0], [1], [0, 0, 1, 1], [], []>} : vector<16x128xf32>, vector<128x512xf32>, vector<16x512xf32> -> vector<16x512xf32>
    %c0_3 = arith.constant 0 : index
    %c0_4 = arith.constant 0 : index
    %3 = vector.load %arg3[%c0_3, %c0_4] : memref<1x512xf32, #tpu.memory_space<vmem>>, vector<1x512xf32>
    %4 = vector.broadcast %3 : vector<1x512xf32> to vector<16x512xf32>
    %5 = arith.addf %2, %4 : vector<16x512xf32>
    %cst_5 = arith.constant 0.707106769 : f32
    %6 = vector.broadcast %cst_5 : f32 to vector<16x512xf32>
    %7 = arith.mulf %5, %6 : vector<16x512xf32>
    %8 = math.absf %7 : vector<16x512xf32>
    %cst_6 = arith.constant 0.327591091 : f32
    %9 = vector.broadcast %cst_6 : f32 to vector<16x512xf32>
    %10 = arith.mulf %9, %8 : vector<16x512xf32>
    %cst_7 = arith.constant 1.000000e+00 : f32
    %11 = vector.broadcast %cst_7 : f32 to vector<16x512xf32>
    %12 = arith.addf %11, %10 : vector<16x512xf32>
    %13 = tpu.reciprocal %12 {approx = true} : vector<16x512xf32> -> vector<16x512xf32>
    %14 = arith.mulf %12, %13 : vector<16x512xf32>
    %cst_8 = arith.constant 2.000000e+00 : f32
    %15 = vector.broadcast %cst_8 : f32 to vector<16x512xf32>
    %16 = arith.subf %15, %14 : vector<16x512xf32>
    %17 = arith.mulf %13, %16 : vector<16x512xf32>
    %cst_9 = arith.constant 1.06140542 : f32
    %18 = vector.broadcast %cst_9 : f32 to vector<16x512xf32>
    %19 = arith.mulf %17, %18 : vector<16x512xf32>
    %cst_10 = arith.constant -1.45315206 : f32
    %20 = vector.broadcast %cst_10 : f32 to vector<16x512xf32>
    %21 = arith.addf %20, %19 : vector<16x512xf32>
    %22 = arith.mulf %17, %21 : vector<16x512xf32>
    %cst_11 = arith.constant 1.42141378 : f32
    %23 = vector.broadcast %cst_11 : f32 to vector<16x512xf32>
    %24 = arith.addf %23, %22 : vector<16x512xf32>
    %25 = arith.mulf %17, %24 : vector<16x512xf32>
    %cst_12 = arith.constant -0.284496725 : f32
    %26 = vector.broadcast %cst_12 : f32 to vector<16x512xf32>
    %27 = arith.addf %26, %25 : vector<16x512xf32>
    %28 = arith.mulf %17, %27 : vector<16x512xf32>
    %cst_13 = arith.constant 0.254829586 : f32
    %29 = vector.broadcast %cst_13 : f32 to vector<16x512xf32>
    %30 = arith.addf %29, %28 : vector<16x512xf32>
    %31 = arith.mulf %17, %30 : vector<16x512xf32>
    %32 = arith.mulf %8, %8 : vector<16x512xf32>
    %cst_14 = arith.constant 0.000000e+00 : f32
    %33 = vector.broadcast %cst_14 : f32 to vector<16x512xf32>
    %34 = arith.subf %33, %32 : vector<16x512xf32>
    %35 = math.exp %34 : vector<16x512xf32>
    %36 = arith.mulf %31, %35 : vector<16x512xf32>
    %cst_15 = arith.constant 1.000000e+00 : f32
    %37 = vector.broadcast %cst_15 : f32 to vector<16x512xf32>
    %38 = arith.subf %37, %36 : vector<16x512xf32>
    %cst_16 = arith.constant 0.000000e+00 : f32
    %39 = vector.broadcast %cst_16 : f32 to vector<16x512xf32>
    %40 = arith.cmpf oge, %7, %39 : vector<16x512xf32>
    %cst_17 = arith.constant 0.000000e+00 : f32
    %41 = vector.broadcast %cst_17 : f32 to vector<16x512xf32>
    %42 = arith.subf %41, %38 : vector<16x512xf32>
    %43 = arith.select %40, %38, %42 : vector<16x512xi1>, vector<16x512xf32>
    %cst_18 = arith.constant 5.000000e-01 : f32
    %44 = vector.broadcast %cst_18 : f32 to vector<16x512xf32>
    %45 = arith.mulf %44, %5 : vector<16x512xf32>
    %cst_19 = arith.constant 1.000000e+00 : f32
    %46 = vector.broadcast %cst_19 : f32 to vector<16x512xf32>
    %47 = arith.addf %46, %43 : vector<16x512xf32>
    %48 = arith.mulf %45, %47 : vector<16x512xf32>
    %c0_20 = arith.constant 0 : index
    %c0_21 = arith.constant 0 : index
    %49 = vector.load %arg4[%c0_20, %c0_21] : memref<512x128xf32, #tpu.memory_space<vmem>>, vector<512x128xf32>
    %cst_22 = arith.constant dense<0.000000e+00> : vector<16x128xf32>
    %50 = tpu.matmul %48, %49, %cst_22 {dimension_numbers = #tpu.dot_dimension_numbers<[1], [0], [0], [1], [0, 0, 1, 1], [], []>} : vector<16x512xf32>, vector<512x128xf32>, vector<16x128xf32> -> vector<16x128xf32>
    %c0_23 = arith.constant 0 : index
    %c0_24 = arith.constant 0 : index
    %51 = vector.load %arg5[%c0_23, %c0_24] : memref<1x128xf32, #tpu.memory_space<vmem>>, vector<1x128xf32>
    %52 = vector.broadcast %51 : vector<1x128xf32> to vector<16x128xf32>
    %53 = arith.addf %50, %52 : vector<16x128xf32>
    %c0_25 = arith.constant 0 : index
    %c0_26 = arith.constant 0 : index
    %54 = vector.load %arg6[%c0_25, %c0_26] : memref<16x128xf32, #tpu.memory_space<vmem>>, vector<16x128xf32>
    tpu.vector_store %arg6[%c0_25, %c0_26], %53 {strides = array<i32>} : memref<16x128xf32, #tpu.memory_space<vmem>>, vector<16x128xf32>,
    return
  }
  func.func @transform_0(%arg0: i32) -> (i32, i32) {
    %c0_i32 = arith.constant 0 : i32
    %c0_i32_0 = arith.constant 0 : i32
    return %arg0, %c0_i32 : i32, i32
  }
  func.func @transform_1(%arg0: i32) -> (i32, i32) {
    %c0_i32 = arith.constant 0 : i32
    %c0_i32_0 = arith.constant 0 : i32
    %c0_i32_1 = arith.constant 0 : i32
    return %c0_i32, %c0_i32_0 : i32, i32
  }
  func.func @transform_2(%arg0: i32) -> (i32, i32) {
    %c0_i32 = arith.constant 0 : i32
    %c0_i32_0 = arith.constant 0 : i32
    %c0_i32_1 = arith.constant 0 : i32
    return %c0_i32, %c0_i32_0 : i32, i32
  }
  func.func @transform_3(%arg0: i32) -> (i32, i32) {
    %c0_i32 = arith.constant 0 : i32
    %c0_i32_0 = arith.constant 0 : i32
    %c0_i32_1 = arith.constant 0 : i32
    return %c0_i32, %c0_i32_0 : i32, i32
  }
  func.func @transform_4(%arg0: i32) -> (i32, i32) {
    %c0_i32 = arith.constant 0 : i32
    %c0_i32_0 = arith.constant 0 : i32
    %c0_i32_1 = arith.constant 0 : i32
    return %c0_i32, %c0_i32_0 : i32, i32
  }
  func.func @transform_5(%arg0: i32) -> (i32, i32) {
    %c0_i32 = arith.constant 0 : i32
    %c0_i32_0 = arith.constant 0 : i32
    return %arg0, %c0_i32 : i32, i32
  }
}

</mosaic_0001>

<llo_original>
// kernel: tpu_custom_call.1
$region0: #{tpu_custom_call.1}
  #allocation0 [shape = 'u32[]', space=smem, size = 0x4, offset = 0x4, fixed_abs, tag = 'smem constant byte address 0x4 - core index']
  #allocation1 [shape = 'u32[72,128]{1,0:T(1,128)}', space=vmem, size = 0x9000, scoped, tag = 'internal scratch']
  %s0 = inlined_call_operand.hbm [shape: f32[16,128], index: 0, kind: input, shape index: {}]
  %s1 = inlined_call_operand.hbm [shape: f32[128,512], index: 1, kind: input, shape index: {}]
  %s2 = inlined_call_operand.hbm [shape: f32[1,512], index: 2, kind: input, shape index: {}]
  %s3 = inlined_call_operand.hbm [shape: f32[512,128], index: 3, kind: input, shape index: {}]
  %s4 = inlined_call_operand.vmem [shape: f32[1,128], index: 4, kind: input, shape index: {}]
  %s5 = inlined_call_operand.hbm [shape: f32[16,128], index: 5, kind: output, shape index: {}]
  %s6 = sld [smem:[#allocation0]]
  $region46: #{tpu_custom_call.1} parent=0
    _
  %s8 = ssub.s32 1, %s6
  %s9 = scalar_select 0, %s8, %s6
  $region1: #{tpu_custom_call.1} parent=0
    #allocation2 [shape = 'u8[8192]{0}', space=vmem, size = 0x2000, scoped, tag = 'input window, operand 0, single buffered']
    #allocation3 [shape = 's32[1]{0}', space=sflag, size = 0x4, scoped, tag = 'scoped memory for tpu_custom_call.1']
    #allocation4 [shape = 's32[1]{0}', space=sflag, size = 0x4, scoped, tag = 'scoped memory for tpu_custom_call.1']
    #allocation5 [shape = 'u8[262144]{0}', space=vmem, size = 0x40000, scoped, tag = 'input window, operand 1, single buffered']
    #allocation6 [shape = 's32[1]{0}', space=sflag, size = 0x4, scoped, tag = 'scoped memory for tpu_custom_call.1']
    #allocation7 [shape = 'u8[2048]{0}', space=vmem, size = 0x800, scoped, tag = 'input window, operand 2, single buffered']
    #allocation8 [shape = 'u8[262144]{0}', space=vmem, size = 0x40000, scoped, tag = 'input window, operand 3, single buffered']
    #allocation9 [shape = 's32[1]{0}', space=sflag, size = 0x4, scoped, tag = 'scoped memory for tpu_custom_call.1']
    #allocation10 [shape = 'u8[8192]{0}', space=vmem, size = 0x2000, scoped, tag = 'output window, operand 0, single buffered']
    %10 = vsyncpa [#allocation3], 0
    %11 = vsyncpa [#allocation6], 0
    %12 = vsyncpa [#allocation9], 0
    %13 = vsyncpa [#allocation4], 0
    // Predicated region
    $region2: #{tpu_custom_call.1} parent=1 // pred_check
      _
    $region3: #{tpu_custom_call.1} parent=1 // pred_check_branch
      %15 = sbr.rel (0) target = $region5
    $region4: #{tpu_custom_call.1} parent=1 // pred_region
      %17 = vsyncadd [#allocation3], 0
      %s18 = sshll.u32 %s0, 4
      %s19 = int_to_ptr.hbm [resolvable:$true] %s18
      %s20 = sshll.u32 [#allocation2], 4
      %s21 = int_to_ptr.vmem [resolvable:$true] %s20
      %26 = dma.hbm_to_vmem [thread:$0]  %s19, 256, %s21, [#allocation3], 128, 128, 8
    $region5: #{tpu_custom_call.1} parent=1 // pred_fallthru
      _
    // Predicated region
    $region6: #{tpu_custom_call.1} parent=1 // pred_check
      _
    $region7: #{tpu_custom_call.1} parent=1 // pred_check_branch
      %28 = sbr.rel (0) target = $region9
    $region8: #{tpu_custom_call.1} parent=1 // pred_region
      %30 = vsyncadd [#allocation6], 0
      %s31 = sshll.u32 %s1, 4
      %s32 = int_to_ptr.hbm [resolvable:$true] %s31
      %s33 = sshll.u32 [#allocation5], 4
      %s34 = int_to_ptr.vmem [resolvable:$true] %s33
      %39 = dma.hbm_to_vmem [thread:$0]  %s32, 8192, %s34, [#allocation6], 512, 512, 32
    $region9: #{tpu_custom_call.1} parent=1 // pred_fallthru
      _
    // Predicated region
    $region10: #{tpu_custom_call.1} parent=1 // pred_check
      _
    $region11: #{tpu_custom_call.1} parent=1 // pred_check_branch
      %41 = sbr.rel (0) target = $region13
    $region12: #{tpu_custom_call.1} parent=1 // pred_region
      %43 = vsyncadd [#allocation6], 0
      %s45 = sshll.u32 %s2, 4
      %s46 = int_to_ptr.hbm [resolvable:$true] %s45
      %s47 = sshll.u32 [#allocation7], 4
      %s48 = int_to_ptr.vmem [resolvable:$true] %s47
      %50 = dma.hbm_to_vmem [thread:$0]  %s46, 64, %s48, [#allocation6]
    $region13: #{tpu_custom_call.1} parent=1 // pred_fallthru
      _
    // Predicated region
    $region14: #{tpu_custom_call.1} parent=1 // pred_check
      _
    $region15: #{tpu_custom_call.1} parent=1 // pred_check_branch
      %52 = sbr.rel (0) target = $region17
    $region16: #{tpu_custom_call.1} parent=1 // pred_region
      %54 = vsyncadd [#allocation9], 0
      %s55 = sshll.u32 %s3, 4
      %s56 = int_to_ptr.hbm [resolvable:$true] %s55
      %s57 = sshll.u32 [#allocation8], 4
      %s58 = int_to_ptr.vmem [resolvable:$true] %s57
      %63 = dma.hbm_to_vmem [thread:$0]  %s56, 8192, %s58, [#allocation9], 128, 128, 8
    $region17: #{tpu_custom_call.1} parent=1 // pred_fallthru
      _
    // Predicated region
    $region18: #{tpu_custom_call.1} parent=1 // pred_check
      _
    $region19: #{tpu_custom_call.1} parent=1 // pred_check_branch
      %65 = sbr.rel (0) target = $region21
    $region20: #{tpu_custom_call.1} parent=1 // pred_region
      _
    $region21: #{tpu_custom_call.1} parent=1 // pred_fallthru
      _
    // Predicated region
    $region22: #{tpu_custom_call.1} parent=1 // pred_check
      _
    $region23: #{tpu_custom_call.1} parent=1 // pred_check_branch
      %67 = sbr.rel (0) target = $region25
    $region24: #{tpu_custom_call.1} parent=1 // pred_region
      %69 = dma.done [#allocation3], 256
    $region25: #{tpu_custom_call.1} parent=1 // pred_fallthru
      _
    // Predicated region
    $region26: #{tpu_custom_call.1} parent=1 // pred_check
      _
    $region27: #{tpu_custom_call.1} parent=1 // pred_check_branch
      %71 = sbr.rel (0) target = $region29
    $region28: #{tpu_custom_call.1} parent=1 // pred_region
      %73 = dma.done [#allocation6], 8192
    $region29: #{tpu_custom_call.1} parent=1 // pred_fallthru
      _
    // Predicated region
    $region30: #{tpu_custom_call.1} parent=1 // pred_check
      _
    $region31: #{tpu_custom_call.1} parent=1 // pred_check_branch
      %75 = sbr.rel (0) target = $region33
    $region32: #{tpu_custom_call.1} parent=1 // pred_region
      %77 = dma.done [#allocation6], 64
    $region33: #{tpu_custom_call.1} parent=1 // pred_fallthru
      _
    // Predicated region
    $region34: #{tpu_custom_call.1} parent=1 // pred_check
      _
    $region35: #{tpu_custom_call.1} parent=1 // pred_check_branch
      %79 = sbr.rel (0) target = $region37
    $region36: #{tpu_custom_call.1} parent=1 // pred_region
      %81 = dma.done [#allocation9], 8192
    $region37: #{tpu_custom_call.1} parent=1 // pred_fallthru
      _
    %v82 = vld [vmem:[#allocation2] sm:$0xff]
    %v83 = vld [vmem:[#allocation2 + $0x8] sm:$0xff]
    %v84 = vld [vmem:[#allocation5] sm:$0xff]
    %v85 = vld [vmem:[#allocation5 + $0x8] sm:$0xff]
    %v86 = vld [vmem:[#allocation5 + $0x10] sm:$0xff]
    %v87 = vld [vmem:[#allocation5 + $0x18] sm:$0xff]
    %v88 = vld [vmem:[#allocation5 + $0x20] sm:$0xff]
    %v89 = vld [vmem:[#allocation5 + $0x28] sm:$0xff]
    %v90 = vld [vmem:[#allocation5 + $0x30] sm:$0xff]
    %v91 = vld [vmem:[#allocation5 + $0x38] sm:$0xff]
    %v92 = vld [vmem:[#allocation5 + $0x40] sm:$0xff]
    %v93 = vld [vmem:[#allocation5 + $0x48] sm:$0xff]
    %v94 = vld [vmem:[#allocation5 + $0x50] sm:$0xff]
    %v95 = vld [vmem:[#allocation5 + $0x58] sm:$0xff]
    %v96 = vld [vmem:[#allocation5 + $0x60] sm:$0xff]
    %v97 = vld [vmem:[#allocation5 + $0x68] sm:$0xff]
    %v98 = vld [vmem:[#allocation5 + $0x70] sm:$0xff]
    %v99 = vld [vmem:[#allocation5 + $0x78] sm:$0xff]
    %v100 = vld [vmem:[#allocation5 + $0x80] sm:$0xff]
    %v101 = vld [vmem:[#allocation5 + $0x88] sm:$0xff]
    %v102 = vld [vmem:[#allocation5 + $0x90] sm:$0xff]
    %v103 = vld [vmem:[#allocation5 + $0x98] sm:$0xff]
    %v104 = vld [vmem:[#allocation5 + $0xa0] sm:$0xff]
    %v105 = vld [vmem:[#allocation5 + $0xa8] sm:$0xff]
    %v106 = vld [vmem:[#allocation5 + $0xb0] sm:$0xff]
    %v107 = vld [vmem:[#allocation5 + $0xb8] sm:$0xff]
    %v108 = vld [vmem:[#allocation5 + $0xc0] sm:$0xff]
    %v109 = vld [vmem:[#allocation5 + $0xc8] sm:$0xff]
    %v110 = vld [vmem:[#allocation5 + $0xd0] sm:$0xff]
    %v111 = vld [vmem:[#allocation5 + $0xd8] sm:$0xff]
    %v112 = vld [vmem:[#allocation5 + $0xe0] sm:$0xff]
    %v113 = vld [vmem:[#allocation5 + $0xe8] sm:$0xff]
    %v114 = vld [vmem:[#allocation5 + $0xf0] sm:$0xff]
    %v115 = vld [vmem:[#allocation5 + $0xf8] sm:$0xff]
    %v116 = vld [vmem:[#allocation5 + $0x100] sm:$0xff]
    %v117 = vld [vmem:[#allocation5 + $0x108] sm:$0xff]
    %v118 = vld [vmem:[#allocation5 + $0x110] sm:$0xff]
    %v119 = vld [vmem:[#allocation5 + $0x118] sm:$0xff]
    %v120 = vld [vmem:[#allocation5 + $0x120] sm:$0xff]
    %v121 = vld [vmem:[#allocation5 + $0x128] sm:$0xff]
    %v122 = vld [vmem:[#allocation5 + $0x130] sm:$0xff]
    %v123 = vld [vmem:[#allocation5 + $0x138] sm:$0xff]
    %v124 = vld [vmem:[#allocation5 + $0x140] sm:$0xff]
    %v125 = vld [vmem:[#allocation5 + $0x148] sm:$0xff]
    %v126 = vld [vmem:[#allocation5 + $0x150] sm:$0xff]
    %v127 = vld [vmem:[#allocation5 + $0x158] sm:$0xff]
    %v128 = vld [vmem:[#allocation5 + $0x160] sm:$0xff]
    %v129 = vld [vmem:[#allocation5 + $0x168] sm:$0xff]
    %v130 = vld [vmem:[#allocation5 + $0x170] sm:$0xff]
    %v131 = vld [vmem:[#allocation5 + $0x178] sm:$0xff]
    %v132 = vld [vmem:[#allocation5 + $0x180] sm:$0xff]
    %v133 = vld [vmem:[#allocation5 + $0x188] sm:$0xff]
    %v134 = vld [vmem:[#allocation5 + $0x190] sm:$0xff]
    %v135 = vld [vmem:[#allocation5 + $0x198] sm:$0xff]
    %v136 = vld [vmem:[#allocation5 + $0x1a0] sm:$0xff]
    %v137 = vld [vmem:[#allocation5 + $0x1a8] sm:$0xff]
    %v138 = vld [vmem:[#allocation5 + $0x1b0] sm:$0xff]
    %v139 = vld [vmem:[#allocation5 + $0x1b8] sm:$0xff]
    %v140 = vld [vmem:[#allocation5 + $0x1c0] sm:$0xff]
    %v141 = vld [vmem:[#allocation5 + $0x1c8] sm:$0xff]
    %v142 = vld [vmem:[#allocation5 + $0x1d0] sm:$0xff]
    %v143 = vld [vmem:[#allocation5 + $0x1d8] sm:$0xff]
    %v144 = vld [vmem:[#allocation5 + $0x1e0] sm:$0xff]
    %v145 = vld [vmem:[#allocation5 + $0x1e8] sm:$0xff]
    %v146 = vld [vmem:[#allocation5 + $0x1f0] sm:$0xff]
    %v147 = vld [vmem:[#allocation5 + $0x1f8] sm:$0xff]
    %v148 = vld [vmem:[#allocation7] sm:$0xf]
    %v150 = vperm.slane %v148, 0
    %v151 = vperm.slane %v148, 1
    %v152 = vperm.slane %v148, 2
    %v153 = vperm.slane %v148, 3
    %158 = vmatpush.msra.mxu0 %v144
    %159 = vmatpush.msra.mxu0 %v140
    %160 = vmatpush.msra.mxu0 %v136
    %161 = vmatpush.msra.mxu0 %v132
    %162 = vmatpush.msra.mxu0 %v128
    %163 = vmatpush.msra.mxu0 %v124
    %164 = vmatpush.msra.mxu0 %v120
    %165 = vmatpush.msra.mxu0 %v116
    %166 = vmatpush.msra.mxu0 %v112
    %167 = vmatpush.msra.mxu0 %v108
    %168 = vmatpush.msra.mxu0 %v104
    %169 = vmatpush.msra.mxu0 %v100
    %170 = vmatpush.msra.mxu0 %v96
    %171 = vmatpush.msra.mxu0 %v92
    %172 = vmatpush.msra.mxu0 %v88
    %173 = vmatpush.msra.mxu0 %v84
    %174 = vmatmul.f32.gmra.mxu0 %v82
    %v175 = vpop.f32.mrf.mxu0
    %v176 = vadd.f32 %v150, %v175
    %177 = vmatmul.f32.gmra.mxu0 %v83
    %v178 = vpop.f32.mrf.mxu0
    %v179 = vadd.f32 %v150, %v178
    %180 = vdwg.mxu0
    %181 = vmatpush.msra.mxu0 %v145
    %182 = vmatpush.msra.mxu0 %v141
    %183 = vmatpush.msra.mxu0 %v137
    %184 = vmatpush.msra.mxu0 %v133
    %185 = vmatpush.msra.mxu0 %v129
    %186 = vmatpush.msra.mxu0 %v125
    %187 = vmatpush.msra.mxu0 %v121
    %188 = vmatpush.msra.mxu0 %v117
    %189 = vmatpush.msra.mxu0 %v113
    %190 = vmatpush.msra.mxu0 %v109
    %191 = vmatpush.msra.mxu0 %v105
    %192 = vmatpush.msra.mxu0 %v101
    %193 = vmatpush.msra.mxu0 %v97
    %194 = vmatpush.msra.mxu0 %v93
    %195 = vmatpush.msra.mxu0 %v89
    %196 = vmatpush.msra.mxu0 %v85
    %197 = vmatmul.f32.gmra.mxu0 %v82
    %v198 = vpop.f32.mrf.mxu0
    %v199 = vadd.f32 %v151, %v198
    %200 = vmatmul.f32.gmra.mxu0 %v83
    %v201 = vpop.f32.mrf.mxu0
    %v202 = vadd.f32 %v151, %v201
    %203 = vdwg.mxu0
    %204 = vmatpush.msra.mxu0 %v146
    %205 = vmatpush.msra.mxu0 %v142
    %206 = vmatpush.msra.mxu0 %v138
    %207 = vmatpush.msra.mxu0 %v134
    %208 = vmatpush.msra.mxu0 %v130
    %209 = vmatpush.msra.mxu0 %v126
    %210 = vmatpush.msra.mxu0 %v122
    %211 = vmatpush.msra.mxu0 %v118
    %212 = vmatpush.msra.mxu0 %v114
    %213 = vmatpush.msra.mxu0 %v110
    %214 = vmatpush.msra.mxu0 %v106
    %215 = vmatpush.msra.mxu0 %v102
    %216 = vmatpush.msra.mxu0 %v98
    %217 = vmatpush.msra.mxu0 %v94
    %218 = vmatpush.msra.mxu0 %v90
    %219 = vmatpush.msra.mxu0 %v86
    %220 = vmatmul.f32.gmra.mxu0 %v82
    %v221 = vpop.f32.mrf.mxu0
    %v222 = vadd.f32 %v152, %v221
    %223 = vmatmul.f32.gmra.mxu0 %v83
    %v224 = vpop.f32.mrf.mxu0
    %v225 = vadd.f32 %v152, %v224
    %226 = vdwg.mxu0
    %227 = vmatpush.msra.mxu0 %v147
    %228 = vmatpush.msra.mxu0 %v143
    %229 = vmatpush.msra.mxu0 %v139
    %230 = vmatpush.msra.mxu0 %v135
    %231 = vmatpush.msra.mxu0 %v131
    %232 = vmatpush.msra.mxu0 %v127
    %233 = vmatpush.msra.mxu0 %v123
    %234 = vmatpush.msra.mxu0 %v119
    %235 = vmatpush.msra.mxu0 %v115
    %236 = vmatpush.msra.mxu0 %v111
    %237 = vmatpush.msra.mxu0 %v107
    %238 = vmatpush.msra.mxu0 %v103
    %239 = vmatpush.msra.mxu0 %v99
    %240 = vmatpush.msra.mxu0 %v95
    %241 = vmatpush.msra.mxu0 %v91
    %242 = vmatpush.msra.mxu0 %v87
    %243 = vmatmul.f32.gmra.mxu0 %v82
    %v244 = vpop.f32.mrf.mxu0
    %v245 = vadd.f32 %v153, %v244
    %246 = vmatmul.f32.gmra.mxu0 %v83
    %v247 = vpop.f32.mrf.mxu0
    %v248 = vadd.f32 %v153, %v247
    %249 = vdwg.mxu0
    %v250 = vmul.f32 %v176, 0.70710677
    %v251 = vmul.f32 %v199, 0.70710677
    %v252 = vmul.f32 %v222, 0.70710677
    %v253 = vmul.f32 %v245, 0.70710677
    %v254 = vmul.f32 %v179, 0.70710677
    %v255 = vmul.f32 %v202, 0.70710677
    %v256 = vmul.f32 %v225, 0.70710677
    %v257 = vmul.f32 %v248, 0.70710677
    %v258 = vand.u32 2147483647, %v250
    %v259 = vand.u32 2147483647, %v251
    %v260 = vand.u32 2147483647, %v252
    %v261 = vand.u32 2147483647, %v253
    %v262 = vand.u32 2147483647, %v254
    %v263 = vand.u32 2147483647, %v255
    %v264 = vand.u32 2147483647, %v256
    %v265 = vand.u32 2147483647, %v257
    %v266 = vmul.f32 %v258, 0.3275911
    %v267 = vmul.f32 %v259, 0.3275911
    %v268 = vmul.f32 %v260, 0.3275911
    %v269 = vmul.f32 %v261, 0.3275911
    %v270 = vmul.f32 %v262, 0.3275911
    %v271 = vmul.f32 %v263, 0.3275911
    %v272 = vmul.f32 %v264, 0.3275911
    %v273 = vmul.f32 %v265, 0.3275911
    %v274 = vadd.f32 %v266, 1.0
    %v275 = vadd.f32 %v267, 1.0
    %v276 = vadd.f32 %v268, 1.0
    %v277 = vadd.f32 %v269, 1.0
    %v278 = vadd.f32 %v270, 1.0
    %v279 = vadd.f32 %v271, 1.0
    %v280 = vadd.f32 %v272, 1.0
    %v281 = vadd.f32 %v273, 1.0
    %v282 = vrcp.pop %v274
    %v283 = vrcp.pop %v275
    %v284 = vrcp.pop %v276
    %v285 = vrcp.pop %v277
    %v286 = vrcp.pop %v278
    %v287 = vrcp.pop %v279
    %v288 = vrcp.pop %v280
    %v289 = vrcp.pop %v281
    %v290 = vmul.f32 %v274, %v282
    %v291 = vmul.f32 %v275, %v283
    %v292 = vmul.f32 %v276, %v284
    %v293 = vmul.f32 %v277, %v285
    %v294 = vmul.f32 %v278, %v286
    %v295 = vmul.f32 %v279, %v287
    %v296 = vmul.f32 %v280, %v288
    %v297 = vmul.f32 %v281, %v289
    %v298 = vsub.f32 2.0, %v290
    %v299 = vsub.f32 2.0, %v291
    %v300 = vsub.f32 2.0, %v292
    %v301 = vsub.f32 2.0, %v293
    %v302 = vsub.f32 2.0, %v294
    %v303 = vsub.f32 2.0, %v295
    %v304 = vsub.f32 2.0, %v296
    %v305 = vsub.f32 2.0, %v297
    %v306 = vmul.f32 %v282, %v298
    %v307 = vmul.f32 %v283, %v299
    %v308 = vmul.f32 %v284, %v300
    %v309 = vmul.f32 %v285, %v301
    %v310 = vmul.f32 %v286, %v302
    %v311 = vmul.f32 %v287, %v303
    %v312 = vmul.f32 %v288, %v304
    %v313 = vmul.f32 %v289, %v305
    %v314 = vmul.f32 %v306, 1.0614054
    %v315 = vmul.f32 %v307, 1.0614054
    %v316 = vmul.f32 %v308, 1.0614054
    %v317 = vmul.f32 %v309, 1.0614054
    %v318 = vmul.f32 %v310, 1.0614054
    %v319 = vmul.f32 %v311, 1.0614054
    %v320 = vmul.f32 %v312, 1.0614054
    %v321 = vmul.f32 %v313, 1.0614054
    %v322 = vadd.f32 %v314, -1.4531521
    %v323 = vadd.f32 %v315, -1.4531521
    %v324 = vadd.f32 %v316, -1.4531521
    %v325 = vadd.f32 %v317, -1.4531521
    %v326 = vadd.f32 %v318, -1.4531521
    %v327 = vadd.f32 %v319, -1.4531521
    %v328 = vadd.f32 %v320, -1.4531521
    %v329 = vadd.f32 %v321, -1.4531521
    %v330 = vmul.f32 %v306, %v322
    %v331 = vmul.f32 %v307, %v323
    %v332 = vmul.f32 %v308, %v324
    %v333 = vmul.f32 %v309, %v325
    %v334 = vmul.f32 %v310, %v326
    %v335 = vmul.f32 %v311, %v327
    %v336 = vmul.f32 %v312, %v328
    %v337 = vmul.f32 %v313, %v329
    %v338 = vadd.f32 %v330, 1.4214138
    %v339 = vadd.f32 %v331, 1.4214138
    %v340 = vadd.f32 %v332, 1.4214138
    %v341 = vadd.f32 %v333, 1.4214138
    %v342 = vadd.f32 %v334, 1.4214138
    %v343 = vadd.f32 %v335, 1.4214138
    %v344 = vadd.f32 %v336, 1.4214138
    %v345 = vadd.f32 %v337, 1.4214138
    %v346 = vmul.f32 %v306, %v338
    %v347 = vmul.f32 %v307, %v339
    %v348 = vmul.f32 %v308, %v340
    %v349 = vmul.f32 %v309, %v341
    %v350 = vmul.f32 %v310, %v342
    %v351 = vmul.f32 %v311, %v343
    %v352 = vmul.f32 %v312, %v344
    %v353 = vmul.f32 %v313, %v345
    %v354 = vadd.f32 %v346, -0.28449672
    %v355 = vadd.f32 %v347, -0.28449672
    %v356 = vadd.f32 %v348, -0.28449672
    %v357 = vadd.f32 %v349, -0.28449672
    %v358 = vadd.f32 %v350, -0.28449672
    %v359 = vadd.f32 %v351, -0.28449672
    %v360 = vadd.f32 %v352, -0.28449672
    %v361 = vadd.f32 %v353, -0.28449672
    %v362 = vmul.f32 %v306, %v354
    %v363 = vmul.f32 %v307, %v355
    %v364 = vmul.f32 %v308, %v356
    %v365 = vmul.f32 %v309, %v357
    %v366 = vmul.f32 %v310, %v358
    %v367 = vmul.f32 %v311, %v359
    %v368 = vmul.f32 %v312, %v360
    %v369 = vmul.f32 %v313, %v361
    %v370 = vadd.f32 %v362, 0.2548296
    %v371 = vadd.f32 %v363, 0.2548296
    %v372 = vadd.f32 %v364, 0.2548296
    %v373 = vadd.f32 %v365, 0.2548296
    %v374 = vadd.f32 %v366, 0.2548296
    %v375 = vadd.f32 %v367, 0.2548296
    %v376 = vadd.f32 %v368, 0.2548296
    %v377 = vadd.f32 %v369, 0.2548296
    %v378 = vmul.f32 %v306, %v370
    %v379 = vmul.f32 %v307, %v371
    %v380 = vmul.f32 %v308, %v372
    %v381 = vmul.f32 %v309, %v373
    %v382 = vmul.f32 %v310, %v374
    %v383 = vmul.f32 %v311, %v375
    %v384 = vmul.f32 %v312, %v376
    %v385 = vmul.f32 %v313, %v377
    %v386 = vmul.f32 %v258, %v258
    %v387 = vmul.f32 %v259, %v259
    %v388 = vmul.f32 %v260, %v260
    %v389 = vmul.f32 %v261, %v261
    %v390 = vmul.f32 %v262, %v262
    %v391 = vmul.f32 %v263, %v263
    %v392 = vmul.f32 %v264, %v264
    %v393 = vmul.f32 %v265, %v265
    %v394 = vsub.f32 0.0, %v386
    %v395 = vsub.f32 0.0, %v387
    %v396 = vsub.f32 0.0, %v388
    %v397 = vsub.f32 0.0, %v389
    %v398 = vsub.f32 0.0, %v390
    %v399 = vsub.f32 0.0, %v391
    %v400 = vsub.f32 0.0, %v392
    %v401 = vsub.f32 0.0, %v393
    %v402 = vmul.f32 %v394, 1.442695
    %v403 = vpow.pop %v402
    %v404 = vmul.f32 %v395, 1.442695
    %v405 = vpow.pop %v404
    %v406 = vmul.f32 %v396, 1.442695
    %v407 = vpow.pop %v406
    %v408 = vmul.f32 %v397, 1.442695
    %v409 = vpow.pop %v408
    %v410 = vmul.f32 %v398, 1.442695
    %v411 = vpow.pop %v410
    %v412 = vmul.f32 %v399, 1.442695
    %v413 = vpow.pop %v412
    %v414 = vmul.f32 %v400, 1.442695
    %v415 = vpow.pop %v414
    %v416 = vmul.f32 %v401, 1.442695
    %v417 = vpow.pop %v416
    %v418 = vmul.f32 %v378, %v403
    %v419 = vmul.f32 %v379, %v405
    %v420 = vmul.f32 %v380, %v407
    %v421 = vmul.f32 %v381, %v409
    %v422 = vmul.f32 %v382, %v411
    %v423 = vmul.f32 %v383, %v413
    %v424 = vmul.f32 %v384, %v415
    %v425 = vmul.f32 %v385, %v417
    %v426 = vsub.f32 1.0, %v418
    %v427 = vsub.f32 1.0, %v419
    %v428 = vsub.f32 1.0, %v420
    %v429 = vsub.f32 1.0, %v421
    %v430 = vsub.f32 1.0, %v422
    %v431 = vsub.f32 1.0, %v423
    %v432 = vsub.f32 1.0, %v424
    %v433 = vsub.f32 1.0, %v425
    %vm434 = vcmp.ge.f32.partialorder %v250, 0.0
    %vm435 = vcmp.ge.f32.partialorder %v251, 0.0
    %vm436 = vcmp.ge.f32.partialorder %v252, 0.0
    %vm437 = vcmp.ge.f32.partialorder %v253, 0.0
    %vm438 = vcmp.ge.f32.partialorder %v254, 0.0
    %vm439 = vcmp.ge.f32.partialorder %v255, 0.0
    %vm440 = vcmp.ge.f32.partialorder %v256, 0.0
    %vm441 = vcmp.ge.f32.partialorder %v257, 0.0
    %v442 = vsub.f32 0.0, %v426
    %v443 = vsub.f32 0.0, %v427
    %v444 = vsub.f32 0.0, %v428
    %v445 = vsub.f32 0.0, %v429
    %v446 = vsub.f32 0.0, %v430
    %v447 = vsub.f32 0.0, %v431
    %v448 = vsub.f32 0.0, %v432
    %v449 = vsub.f32 0.0, %v433
    %v450 = vsel %vm434, %v426, %v442
    %v451 = vsel %vm435, %v427, %v443
    %v452 = vsel %vm436, %v428, %v444
    %v453 = vsel %vm437, %v429, %v445
    %v454 = vsel %vm438, %v430, %v446
    %v455 = vsel %vm439, %v431, %v447
    %v456 = vsel %vm440, %v432, %v448
    %v457 = vsel %vm441, %v433, %v449
    %v458 = vmul.f32 %v176, 0.5
    %v459 = vmul.f32 %v199, 0.5
    %v460 = vmul.f32 %v222, 0.5
    %v461 = vmul.f32 %v245, 0.5
    %v462 = vmul.f32 %v179, 0.5
    %v463 = vmul.f32 %v202, 0.5
    %v464 = vmul.f32 %v225, 0.5
    %v465 = vmul.f32 %v248, 0.5
    %v466 = vadd.f32 %v450, 1.0
    %v467 = vadd.f32 %v451, 1.0
    %v468 = vadd.f32 %v452, 1.0
    %v469 = vadd.f32 %v453, 1.0
    %v470 = vadd.f32 %v454, 1.0
    %v471 = vadd.f32 %v455, 1.0
    %v472 = vadd.f32 %v456, 1.0
    %v473 = vadd.f32 %v457, 1.0
    %v474 = vmul.f32 %v458, %v466
    %v475 = vmul.f32 %v459, %v467
    %v476 = vmul.f32 %v460, %v468
    %v477 = vmul.f32 %v461, %v469
    %v478 = vmul.f32 %v462, %v470
    %v479 = vmul.f32 %v463, %v471
    %v480 = vmul.f32 %v464, %v472
    %v481 = vmul.f32 %v465, %v473
    %v482 = vld [vmem:[#allocation8] sm:$0xff]
    %v483 = vld [vmem:[#allocation8 + $0x8] sm:$0xff]
    %v484 = vld [vmem:[#allocation8 + $0x10] sm:$0xff]
    %v485 = vld [vmem:[#allocation8 + $0x18] sm:$0xff]
    %v486 = vld [vmem:[#allocation8 + $0x20] sm:$0xff]
    %v487 = vld [vmem:[#allocation8 + $0x28] sm:$0xff]
    %v488 = vld [vmem:[#allocation8 + $0x30] sm:$0xff]
    %v489 = vld [vmem:[#allocation8 + $0x38] sm:$0xff]
    %v490 = vld [vmem:[#allocation8 + $0x40] sm:$0xff]
    %v491 = vld [vmem:[#allocation8 + $0x48] sm:$0xff]
    %v492 = vld [vmem:[#allocation8 + $0x50] sm:$0xff]
    %v493 = vld [vmem:[#allocation8 + $0x58] sm:$0xff]
    %v494 = vld [vmem:[#allocation8 + $0x60] sm:$0xff]
    %v495 = vld [vmem:[#allocation8 + $0x68] sm:$0xff]
    %v496 = vld [vmem:[#allocation8 + $0x70] sm:$0xff]
    %v497 = vld [vmem:[#allocation8 + $0x78] sm:$0xff]
    %v498 = vld [vmem:[#allocation8 + $0x80] sm:$0xff]
    %v499 = vld [vmem:[#allocation8 + $0x88] sm:$0xff]
    %v500 = vld [vmem:[#allocation8 + $0x90] sm:$0xff]
    %v501 = vld [vmem:[#allocation8 + $0x98] sm:$0xff]
    %v502 = vld [vmem:[#allocation8 + $0xa0] sm:$0xff]
    %v503 = vld [vmem:[#allocation8 + $0xa8] sm:$0xff]
    %v504 = vld [vmem:[#allocation8 + $0xb0] sm:$0xff]
    %v505 = vld [vmem:[#allocation8 + $0xb8] sm:$0xff]
    %v506 = vld [vmem:[#allocation8 + $0xc0] sm:$0xff]
    %v507 = vld [vmem:[#allocation8 + $0xc8] sm:$0xff]
    %v508 = vld [vmem:[#allocation8 + $0xd0] sm:$0xff]
    %v509 = vld [vmem:[#allocation8 + $0xd8] sm:$0xff]
    %v510 = vld [vmem:[#allocation8 + $0xe0] sm:$0xff]
    %v511 = vld [vmem:[#allocation8 + $0xe8] sm:$0xff]
    %v512 = vld [vmem:[#allocation8 + $0xf0] sm:$0xff]
    %v513 = vld [vmem:[#allocation8 + $0xf8] sm:$0xff]
    %v514 = vld [vmem:[#allocation8 + $0x100] sm:$0xff]
    %v515 = vld [vmem:[#allocation8 + $0x108] sm:$0xff]
    %v516 = vld [vmem:[#allocation8 + $0x110] sm:$0xff]
    %v517 = vld [vmem:[#allocation8 + $0x118] sm:$0xff]
    %v518 = vld [vmem:[#allocation8 + $0x120] sm:$0xff]
    %v519 = vld [vmem:[#allocation8 + $0x128] sm:$0xff]
    %v520 = vld [vmem:[#allocation8 + $0x130] sm:$0xff]
    %v521 = vld [vmem:[#allocation8 + $0x138] sm:$0xff]
    %v522 = vld [vmem:[#allocation8 + $0x140] sm:$0xff]
    %v523 = vld [vmem:[#allocation8 + $0x148] sm:$0xff]
    %v524 = vld [vmem:[#allocation8 + $0x150] sm:$0xff]
    %v525 = vld [vmem:[#allocation8 + $0x158] sm:$0xff]
    %v526 = vld [vmem:[#allocation8 + $0x160] sm:$0xff]
    %v527 = vld [vmem:[#allocation8 + $0x168] sm:$0xff]
    %v528 = vld [vmem:[#allocation8 + $0x170] sm:$0xff]
    %v529 = vld [vmem:[#allocation8 + $0x178] sm:$0xff]
    %v530 = vld [vmem:[#allocation8 + $0x180] sm:$0xff]
    %v531 = vld [vmem:[#allocation8 + $0x188] sm:$0xff]
    %v532 = vld [vmem:[#allocation8 + $0x190] sm:$0xff]
    %v533 = vld [vmem:[#allocation8 + $0x198] sm:$0xff]
    %v534 = vld [vmem:[#allocation8 + $0x1a0] sm:$0xff]
    %v535 = vld [vmem:[#allocation8 + $0x1a8] sm:$0xff]
    %v536 = vld [vmem:[#allocation8 + $0x1b0] sm:$0xff]
    %v537 = vld [vmem:[#allocation8 + $0x1b8] sm:$0xff]
    %v538 = vld [vmem:[#allocation8 + $0x1c0] sm:$0xff]
    %v539 = vld [vmem:[#allocation8 + $0x1c8] sm:$0xff]
    %v540 = vld [vmem:[#allocation8 + $0x1d0] sm:$0xff]
    %v541 = vld [vmem:[#allocation8 + $0x1d8] sm:$0xff]
    %v542 = vld [vmem:[#allocation8 + $0x1e0] sm:$0xff]
    %v543 = vld [vmem:[#allocation8 + $0x1e8] sm:$0xff]
    %v544 = vld [vmem:[#allocation8 + $0x1f0] sm:$0xff]
    %v545 = vld [vmem:[#allocation8 + $0x1f8] sm:$0xff]
    %v546 = vld [vmem:[%s4] sm:$0x1]
    %v548 = vperm.slane %v546, 0
    %550 = vmatpush.msra.mxu0 %v497
    %551 = vmatpush.msra.mxu0 %v496
    %552 = vmatpush.msra.mxu0 %v495
    %553 = vmatpush.msra.mxu0 %v494
    %554 = vmatpush.msra.mxu0 %v493
    %555 = vmatpush.msra.mxu0 %v492
    %556 = vmatpush.msra.mxu0 %v491
    %557 = vmatpush.msra.mxu0 %v490
    %558 = vmatpush.msra.mxu0 %v489
    %559 = vmatpush.msra.mxu0 %v488
    %560 = vmatpush.msra.mxu0 %v487
    %561 = vmatpush.msra.mxu0 %v486
    %562 = vmatpush.msra.mxu0 %v485
    %563 = vmatpush.msra.mxu0 %v484
    %564 = vmatpush.msra.mxu0 %v483
    %565 = vmatpush.msra.mxu0 %v482
    %566 = vmatmul.f32.gmra.mxu0 %v474
    %v567 = vpop.f32.mrf.mxu0
    %v568 = vadd.f32 %v548, %v567
    %569 = vmatmul.f32.gmra.mxu0 %v478
    %v570 = vpop.f32.mrf.mxu0
    %v571 = vadd.f32 %v548, %v570
    %572 = vdwg.mxu0
    %573 = vmatpush.msra.mxu0 %v513
    %574 = vmatpush.msra.mxu0 %v512
    %575 = vmatpush.msra.mxu0 %v511
    %576 = vmatpush.msra.mxu0 %v510
    %577 = vmatpush.msra.mxu0 %v509
    %578 = vmatpush.msra.mxu0 %v508
    %579 = vmatpush.msra.mxu0 %v507
    %580 = vmatpush.msra.mxu0 %v506
    %581 = vmatpush.msra.mxu0 %v505
    %582 = vmatpush.msra.mxu0 %v504
    %583 = vmatpush.msra.mxu0 %v503
    %584 = vmatpush.msra.mxu0 %v502
    %585 = vmatpush.msra.mxu0 %v501
    %586 = vmatpush.msra.mxu0 %v500
    %587 = vmatpush.msra.mxu0 %v499
    %588 = vmatpush.msra.mxu0 %v498
    %589 = vmatmul.f32.gmra.mxu0 %v475
    %v590 = vpop.f32.mrf.mxu0
    %v591 = vadd.f32 %v568, %v590
    %592 = vmatmul.f32.gmra.mxu0 %v479
    %v593 = vpop.f32.mrf.mxu0
    %v594 = vadd.f32 %v571, %v593
    %595 = vdwg.mxu0
    %596 = vmatpush.msra.mxu0 %v529
    %597 = vmatpush.msra.mxu0 %v528
    %598 = vmatpush.msra.mxu0 %v527
    %599 = vmatpush.msra.mxu0 %v526
    %600 = vmatpush.msra.mxu0 %v525
    %601 = vmatpush.msra.mxu0 %v524
    %602 = vmatpush.msra.mxu0 %v523
    %603 = vmatpush.msra.mxu0 %v522
    %604 = vmatpush.msra.mxu0 %v521
    %605 = vmatpush.msra.mxu0 %v520
    %606 = vmatpush.msra.mxu0 %v519
    %607 = vmatpush.msra.mxu0 %v518
    %608 = vmatpush.msra.mxu0 %v517
    %609 = vmatpush.msra.mxu0 %v516
    %610 = vmatpush.msra.mxu0 %v515
    %611 = vmatpush.msra.mxu0 %v514
    %612 = vmatmul.f32.gmra.mxu0 %v476
    %v613 = vpop.f32.mrf.mxu0
    %v614 = vadd.f32 %v591, %v613
    %615 = vmatmul.f32.gmra.mxu0 %v480
    %v616 = vpop.f32.mrf.mxu0
    %v617 = vadd.f32 %v594, %v616
    %618 = vdwg.mxu0
    %619 = vmatpush.msra.mxu0 %v545
    %620 = vmatpush.msra.mxu0 %v544
    %621 = vmatpush.msra.mxu0 %v543
    %622 = vmatpush.msra.mxu0 %v542
    %623 = vmatpush.msra.mxu0 %v541
    %624 = vmatpush.msra.mxu0 %v540
    %625 = vmatpush.msra.mxu0 %v539
    %626 = vmatpush.msra.mxu0 %v538
    %627 = vmatpush.msra.mxu0 %v537
    %628 = vmatpush.msra.mxu0 %v536
    %629 = vmatpush.msra.mxu0 %v535
    %630 = vmatpush.msra.mxu0 %v534
    %631 = vmatpush.msra.mxu0 %v533
    %632 = vmatpush.msra.mxu0 %v532
    %633 = vmatpush.msra.mxu0 %v531
    %634 = vmatpush.msra.mxu0 %v530
    %635 = vmatmul.f32.gmra.mxu0 %v477
    %v636 = vpop.f32.mrf.mxu0
    %v637 = vadd.f32 %v614, %v636
    %638 = vmatmul.f32.gmra.mxu0 %v481
    %v639 = vpop.f32.mrf.mxu0
    %v640 = vadd.f32 %v617, %v639
    %641 = vdwg.mxu0
    %642 = vst [vmem:[#allocation10] sm:$0xff] %v637
    %643 = vst [vmem:[#allocation10 + $0x8] sm:$0xff] %v640
    // Predicated region
    $region38: #{tpu_custom_call.1} parent=1 // pred_check
      _
    $region39: #{tpu_custom_call.1} parent=1 // pred_check_branch
      %645 = sbr.rel (0) target = $region41
    $region40: #{tpu_custom_call.1} parent=1 // pred_region
      %647 = vsyncadd [#allocation4], 0
      %s648 = sshll.u32 [#allocation10], 4
      %s649 = int_to_ptr.vmem [resolvable:$true] %s648
      %s650 = sshll.u32 %s5, 4
      %s651 = int_to_ptr.hbm [resolvable:$true] %s650
      %656 = dma.vmem_to_hbm [thread:$0]  %s649, 256, %s651, [#allocation4], 128, 128, 8
    $region41: #{tpu_custom_call.1} parent=1 // pred_fallthru
      _
    // Predicated region
    $region42: #{tpu_custom_call.1} parent=1 // pred_check
      _
    $region43: #{tpu_custom_call.1} parent=1 // pred_check_branch
      %658 = sbr.rel (0) target = $region45
    $region44: #{tpu_custom_call.1} parent=1 // pred_region
      %660 = dma.done [#allocation4], 256
    $region45: #{tpu_custom_call.1} parent=1 // pred_fallthru
      _
    %661 = vsyncpa [#allocation3], 1
    %662 = vsyncpa [#allocation6], 1
    %663 = vsyncpa [#allocation9], 1
    %664 = vsyncpa [#allocation4], 1

</llo_original>
